<compile_context>
chip_gen: v7x
topology: tpu7x:2x2x1
jax: 0.10.0
libtpu: 0.0.40
codegen_flags: <defaults>
</compile_context>

<pallas_src>
import functools
import math

import jax
import jax.numpy as jnp
from jax import lax
from jax.experimental import pallas as pl
from jax.experimental.pallas import tpu as pltpu

_LN_EPS = 1e-5  # torch.nn.LayerNorm default eps


def _prenorm_ffn_kernel(x_ref, g_ref, be_ref, w1_ref, b1_ref, w2_ref, b2_ref,
                        o_ref, xn_ref, acc_ref, *, exact_gelu):
    # Grid: (row tiles [parallel], hidden chunks [arbitrary / reduction]).
    # x_ref: (TM, dim); gamma/beta/b2: (1, dim); w1: (dim, TH); b1: (1, TH);
    # w2: (TH, dim); o_ref: (TM, dim); xn_ref: (TM, dim) cache; acc_ref: (TM, dim) f32.
    k = pl.program_id(1)
    nk = pl.num_programs(1)

    @pl.when(k == 0)
    def _():
        # ---- PreNorm: LayerNorm over features (f32 stats, biased variance) ----
        x = x_ref[...].astype(jnp.float32)
        mean = jnp.mean(x, axis=-1, keepdims=True)
        xc = x - mean
        var = jnp.mean(xc * xc, axis=-1, keepdims=True)
        xn = xc * lax.rsqrt(var + _LN_EPS)
        xn = xn * g_ref[...].astype(jnp.float32) + be_ref[...].astype(jnp.float32)
        xn_ref[...] = xn.astype(xn_ref.dtype)        # cached for every hidden chunk
        acc_ref[...] = jnp.zeros_like(acc_ref)

    # ---- fn = FeedForward over one hidden chunk ----
    # Matmuls run in the weights' dtype (bf16/f32) with f32 MXU accumulation;
    # bias adds and GELU stay f32.
    h = jnp.dot(xn_ref[...], w1_ref[...], preferred_element_type=jnp.float32)
    h = h + b1_ref[...].astype(jnp.float32)
    if exact_gelu:
        # exact erf GELU (matches torch.nn.GELU() default)
        h = 0.5 * h * (1.0 + lax.erf(h * (1.0 / math.sqrt(2.0))))
    else:
        # tanh-approx GELU: routes through the EUP slot, frees VALU issue slots
        h = jax.nn.gelu(h, approximate=True)
    # Dropout(p=0.0) is the identity; add a pltpu PRNG mask here if p > 0 is ever needed.
    acc_ref[...] += jnp.dot(h.astype(w2_ref.dtype), w2_ref[...],
                            preferred_element_type=jnp.float32)

    @pl.when(k == nk - 1)
    def _():
        o_ref[...] = (acc_ref[...] + b2_ref[...].astype(jnp.float32)).astype(o_ref.dtype)


def _round_up(n, m):
    return ((n + m - 1) // m) * m


def _vmem_cap_bytes():
    """Generation-aware scoped-VMEM cap (host query at trace time)."""
    kind = ""
    try:
        kind = jax.devices()[0].device_kind.lower()
    except Exception:
        pass
    if ("v5" in kind) or ("v6" in kind) or ("v4" in kind):
        return 100 * 1024 * 1024   # 128 MiB physical: allow large row tiles / f32 weights
    if "v7" in kind:
        return 56 * 1024 * 1024    # 64 MiB physical per TC: keep headroom for scratch/sems
    return 48 * 1024 * 1024        # unknown chip: conservative


@functools.partial(
    jax.jit,
    static_argnames=("tile_m", "hidden_chunk", "matmul_dtype",
                     "single_buffer_weights", "gelu_approximate", "stream_buffers"))
def pre_norm_feed_forward(x, gamma, beta, w1, b1, w2, b2, *,
                          tile_m=512, hidden_chunk=2048, matmul_dtype="bfloat16",
                          single_buffer_weights=True, gelu_approximate=False,
                          stream_buffers=2):
    """PreNorm(dim, FeedForward(dim, hidden)).  x: (B, S, dim) -> (B, S, dim).

    For best performance dim and hidden should be multiples of 128 (ideally 256
    on v6e/v7x): lane-dense unmasked stores and full MXU width.  Small/odd sizes
    (like the toy test shapes below) remain correct, just lane-underfilled.
    """
    B, S, dim = x.shape
    hidden = w1.shape[1]
    rows = B * S
    x2 = x.reshape(rows, dim)

    # Row tile: multiple of 8 sublanes, never larger than the rounded-up row count.
    # The tail block (rows % tm != 0) is handled by Pallas OOB masking - no host pad.
    tm = min(int(tile_m), _round_up(rows, 8))
    tm = max(8, (tm // 8) * 8)
    grid_rows = pl.cdiv(rows, tm)

    # Hidden-dim chunking bounds resident weights and the (tm, TH) f32 GELU temp.
    # Only used when it divides hidden cleanly: an OOB hidden tail would feed
    # garbage into the contraction (unlike the masked row tail).
    if hidden > hidden_chunk > 0 and hidden % hidden_chunk == 0 and hidden_chunk % 128 == 0:
        th = int(hidden_chunk)
    else:
        th = hidden
    nk = hidden // th

    # bf16 matmul operands by default (halves weight HBM/VMEM, native MXU rate);
    # LayerNorm, biases, GELU and accumulation stay f32.
    wdtype = jnp.dtype(matmul_dtype)
    w1c = w1.astype(wdtype)
    w2c = w2.astype(wdtype)

    gamma2 = gamma.reshape(1, dim).astype(jnp.float32)
    beta2 = beta.reshape(1, dim).astype(jnp.float32)
    b1_2d = b1.reshape(1, hidden).astype(jnp.float32)
    b2_2d = b2.reshape(1, dim).astype(jnp.float32)

    # ---- BlockSpecs -------------------------------------------------------
    def _const_spec(shape):
        # Constant block index -> never re-fetched across grid steps; single-buffer
        # so LN params / b2 don't take 2x VMEM.
        if single_buffer_weights:
            return pl.BlockSpec(shape, lambda i, k: (0,) * len(shape),
                                pipeline_mode=pl.Buffered(1))
        return pl.BlockSpec(shape, lambda i, k: (0,) * len(shape))

    single_w = single_buffer_weights and nk == 1   # weights constant only if unchunked
    w_kwargs = {"pipeline_mode": pl.Buffered(1)} if single_w else {}
    x_kwargs = ({"pipeline_mode": pl.Buffered(int(stream_buffers))}
                if int(stream_buffers) != 2 else {})

    in_specs = [
        pl.BlockSpec((tm, dim), lambda i, k: (i, 0), **x_kwargs),   # x rows (streamed)
        _const_spec((1, dim)),                                       # gamma
        _const_spec((1, dim)),                                       # beta
        pl.BlockSpec((dim, th), lambda i, k: (0, k), **w_kwargs),    # w1 column chunk
        pl.BlockSpec((1, th), lambda i, k: (0, k), **w_kwargs),      # b1 chunk
        pl.BlockSpec((th, dim), lambda i, k: (k, 0), **w_kwargs),    # w2 row chunk
        _const_spec((1, dim)),                                       # b2
    ]
    out_spec = pl.BlockSpec((tm, dim), lambda i, k: (i, 0))

    # ---- VMEM budget / cost estimate --------------------------------------
    x_itemsize = jnp.dtype(x.dtype).itemsize
    w_itemsize = wdtype.itemsize
    w_chunk_bytes = 2 * dim * th * w_itemsize + th * 4        # w1 + w2 chunk + b1 chunk
    const_bytes = 3 * dim * 4                                  # gamma, beta, b2 (f32)
    weight_resident = const_bytes + w_chunk_bytes * (1 if single_w else 2)
    stream_bytes = (int(stream_buffers) + 2) * tm * dim * x_itemsize   # x + out buffers
    scratch_bytes = tm * dim * (w_itemsize + 4)                        # xn cache + f32 acc
    temp_bytes = tm * th * 4                                           # h temporary
    vmem_need = weight_resident + stream_bytes + scratch_bytes + temp_bytes
    vmem_limit = int(min(max(2 * vmem_need, 32 * 1024 * 1024), _vmem_cap_bytes()))

    full_weight_bytes = 2 * dim * hidden * w_itemsize + (hidden + 3 * dim) * 4
    cost = pl.CostEstimate(
        flops=4 * rows * dim * hidden + 10 * rows * dim,
        transcendentals=rows * hidden,
        bytes_accessed=(2 * rows * dim * x_itemsize                     # x read + out write
                        + full_weight_bytes * (grid_rows if nk > 1 else 1)),
    )

    kernel = functools.partial(_prenorm_ffn_kernel, exact_gelu=not gelu_approximate)

    out = pl.pallas_call(
        kernel,
        out_shape=jax.ShapeDtypeStruct((rows, dim), x.dtype),
        grid_spec=pltpu.PrefetchScalarGridSpec(
            num_scalar_prefetch=0,
            grid=(grid_rows, nk),            # reduction (hidden) axis innermost
            in_specs=in_specs,
            out_specs=out_spec,
            scratch_shapes=[pltpu.VMEM((tm, dim), wdtype),        # LayerNorm(x) cache
                            pltpu.VMEM((tm, dim), jnp.float32)],  # output accumulator
        ),
        compiler_params=pltpu.CompilerParams(
            dimension_semantics=("parallel", "arbitrary"),  # row tiles shard across TCs
            vmem_limit_bytes=vmem_limit,
        ),
        cost_estimate=cost,
    )(x2, gamma2, beta2, w1c, b1_2d, w2c, b2_2d)

    return out.reshape(B, S, dim)


def _reference(x, gamma, beta, w1, b1, w2, b2):
    mu = jnp.mean(x, axis=-1, keepdims=True)
    var = jnp.mean(jnp.square(x - mu), axis=-1, keepdims=True)
    xn = (x - mu) * lax.rsqrt(var + _LN_EPS) * gamma + beta
    h = jnp.dot(xn, w1) + b1
    h = jax.nn.gelu(h, approximate=False)
    return jnp.dot(h, w2) + b2


if __name__ == "__main__":
    # small shapes consistent with the module: batch=2, seq=8, dim=32, hidden=64
    B, S, DIM, HID = 2, 8, 32, 64
    key = jax.random.PRNGKey(0)
    kx, kg, kb, kw1, kw2, kb1, kb2 = jax.random.split(key, 7)

    x = jax.random.normal(kx, (B, S, DIM), dtype=jnp.float32)
    gamma = 1.0 + 0.1 * jax.random.normal(kg, (DIM,), dtype=jnp.float32)
    beta = 0.1 * jax.random.normal(kb, (DIM,), dtype=jnp.float32)
    w1 = jax.random.normal(kw1, (DIM, HID), dtype=jnp.float32) / math.sqrt(DIM)
    w2 = jax.random.normal(kw2, (HID, DIM), dtype=jnp.float32) / math.sqrt(HID)
    b1 = 1e-2 * jax.random.normal(kb1, (HID,), dtype=jnp.float32)
    b2 = 1e-2 * jax.random.normal(kb2, (DIM,), dtype=jnp.float32)

    y_ref = _reference(x, gamma, beta, w1, b1, w2, b2)

    # Default production config: bf16 matmul operands, f32 stats/accumulation.
    y = pre_norm_feed_forward(x, gamma, beta, w1, b1, w2, b2)
    jax.block_until_ready(y)
    assert y.shape == (B, S, DIM)
    assert jnp.allclose(y, y_ref, atol=5e-2, rtol=5e-2), "bf16 mismatch vs reference"

    # Exact-math path (f32 weights) matches the torch module tightly.
    y32 = pre_norm_feed_forward(x, gamma, beta, w1, b1, w2, b2,
                                matmul_dtype="float32")
    jax.block_until_ready(y32)
    assert jnp.allclose(y32, y_ref, atol=1e-5, rtol=1e-5), "f32 mismatch vs reference"

    # Multi-step row grid + masked OOB tail (no host pad): rows=18, tile_m=8 -> grid=(3, 1).
    x3 = jax.random.normal(kx, (2, 9, DIM), dtype=jnp.float32)
    y3_ref = _reference(x3, gamma, beta, w1, b1, w2, b2)
    y3 = pre_norm_feed_forward(x3, gamma, beta, w1, b1, w2, b2,
                               tile_m=8, matmul_dtype="float32")
    jax.block_until_ready(y3)
    assert y3.shape == (2, 9, DIM)
    assert jnp.allclose(y3, y3_ref, atol=1e-5, rtol=1e-5), "tail-masking mismatch"

    print("KERNEL_OK")
</pallas_src>

<mosaic_0001>
module attributes {stable_mosaic.version = 11 : i64} {
  func.func @_prenorm_ffn_kernel(%arg0: i32, %arg1: i32, %arg2: memref<16x32xf32, #tpu.memory_space<vmem>>, %arg3: memref<1x32xf32, #tpu.memory_space<vmem>>, %arg4: memref<1x32xf32, #tpu.memory_space<vmem>>, %arg5: memref<32x64xbf16, #tpu.memory_space<vmem>>, %arg6: memref<1x64xf32, #tpu.memory_space<vmem>>, %arg7: memref<64x32xbf16, #tpu.memory_space<vmem>>, %arg8: memref<1x32xf32, #tpu.memory_space<vmem>>, %arg9: memref<16x32xf32, #tpu.memory_space<vmem>>, %arg10: memref<16x32xbf16, #tpu.memory_space<vmem>>, %arg11: memref<16x32xf32, #tpu.memory_space<vmem>>) attributes {dimension_semantics = [#tpu.dimension_semantics<parallel>, #tpu.dimension_semantics<arbitrary>], iteration_bounds = array<i64: 1, 1>, scalar_prefetch = 0 : i64, scratch_operands = 2 : i64, tpu.core_type = #tpu.core_type<tc>, window_params = [{transform_indices = @transform_0, window_bounds = array<i64: 16, 32>}, {pipeline_mode = #tpu.pipeline_mode<synchronous>, transform_indices = @transform_1, window_bounds = array<i64: 1, 32>}, {pipeline_mode = #tpu.pipeline_mode<synchronous>, transform_indices = @transform_2, window_bounds = array<i64: 1, 32>}, {pipeline_mode = #tpu.pipeline_mode<synchronous>, transform_indices = @transform_3, window_bounds = array<i64: 32, 64>}, {pipeline_mode = #tpu.pipeline_mode<synchronous>, transform_indices = @transform_4, window_bounds = array<i64: 1, 64>}, {pipeline_mode = #tpu.pipeline_mode<synchronous>, transform_indices = @transform_5, window_bounds = array<i64: 64, 32>}, {pipeline_mode = #tpu.pipeline_mode<synchronous>, transform_indices = @transform_6, window_bounds = array<i64: 1, 32>}, {transform_indices = @transform_7, window_bounds = array<i64: 16, 32>}]} {
    %c0_i32 = arith.constant 0 : i32
    %0 = arith.cmpi eq, %arg1, %c0_i32 : i32
    %1 = arith.extui %0 : i1 to i32
    %c0_i32_0 = arith.constant 0 : i32
    %2 = arith.cmpi ne, %1, %c0_i32_0 : i32
    scf.if %2 {
      %c0_18 = arith.constant 0 : index
      %c0_19 = arith.constant 0 : index
      %26 = vector.load %arg2[%c0_18, %c0_19] : memref<16x32xf32, #tpu.memory_space<vmem>>, vector<16x32xf32>
      %cst_20 = arith.constant dense<0.000000e+00> : vector<16xf32>
      %27 = vector.multi_reduction <add>, %26, %cst_20 [1] : vector<16x32xf32> to vector<16xf32>
      %28 = vector.shape_cast %27 : vector<16xf32> to vector<16x1xf32>
      %cst_21 = arith.constant 3.200000e+01 : f32
      %29 = vector.broadcast %cst_21 : f32 to vector<16x1xf32>
      %30 = arith.divf %28, %29 : vector<16x1xf32>
      %31 = vector.broadcast %30 : vector<16x1xf32> to vector<16x32xf32>
      %32 = arith.subf %26, %31 : vector<16x32xf32>
      %33 = arith.mulf %32, %32 : vector<16x32xf32>
      %cst_22 = arith.constant dense<0.000000e+00> : vector<16xf32>
      %34 = vector.multi_reduction <add>, %33, %cst_22 [1] : vector<16x32xf32> to vector<16xf32>
      %35 = vector.shape_cast %34 : vector<16xf32> to vector<16x1xf32>
      %cst_23 = arith.constant 3.200000e+01 : f32
      %36 = vector.broadcast %cst_23 : f32 to vector<16x1xf32>
      %37 = arith.divf %35, %36 : vector<16x1xf32>
      %cst_24 = arith.constant 9.99999974E-6 : f32
      %38 = vector.broadcast %cst_24 : f32 to vector<16x1xf32>
      %39 = arith.addf %37, %38 : vector<16x1xf32>
      %40 = math.rsqrt %39 : vector<16x1xf32>
      %41 = vector.broadcast %40 : vector<16x1xf32> to vector<16x32xf32>
      %42 = arith.mulf %32, %41 : vector<16x32xf32>
      %c0_25 = arith.constant 0 : index
      %c0_26 = arith.constant 0 : index
      %43 = vector.load %arg3[%c0_25, %c0_26] : memref<1x32xf32, #tpu.memory_space<vmem>>, vector<1x32xf32>
      %44 = vector.broadcast %43 : vector<1x32xf32> to vector<16x32xf32>
      %45 = arith.mulf %42, %44 : vector<16x32xf32>
      %c0_27 = arith.constant 0 : index
      %c0_28 = arith.constant 0 : index
      %46 = vector.load %arg4[%c0_27, %c0_28] : memref<1x32xf32, #tpu.memory_space<vmem>>, vector<1x32xf32>
      %47 = vector.broadcast %46 : vector<1x32xf32> to vector<16x32xf32>
      %48 = arith.addf %45, %47 : vector<16x32xf32>
      %49 = arith.truncf %48 : vector<16x32xf32> to vector<16x32xbf16>
      %c0_29 = arith.constant 0 : index
      %c0_30 = arith.constant 0 : index
      %50 = vector.load %arg10[%c0_29, %c0_30] : memref<16x32xbf16, #tpu.memory_space<vmem>>, vector<16x32xbf16>
      tpu.vector_store %arg10[%c0_29, %c0_30], %49 {strides = array<i32>} : memref<16x32xbf16, #tpu.memory_space<vmem>>, vector<16x32xbf16>,
      %cst_31 = arith.constant 0.000000e+00 : f32
      %51 = vector.broadcast %cst_31 : f32 to vector<16x32xf32>
      %c0_32 = arith.constant 0 : index
      %c0_33 = arith.constant 0 : index
      %52 = vector.load %arg11[%c0_32, %c0_33] : memref<16x32xf32, #tpu.memory_space<vmem>>, vector<16x32xf32>
      tpu.vector_store %arg11[%c0_32, %c0_33], %51 {strides = array<i32>} : memref<16x32xf32, #tpu.memory_space<vmem>>, vector<16x32xf32>,
    } else {
    }
    %c0 = arith.constant 0 : index
    %c0_1 = arith.constant 0 : index
    %3 = vector.load %arg10[%c0, %c0_1] : memref<16x32xbf16, #tpu.memory_space<vmem>>, vector<16x32xbf16>
    %c0_2 = arith.constant 0 : index
    %c0_3 = arith.constant 0 : index
    %4 = vector.load %arg5[%c0_2, %c0_3] : memref<32x64xbf16, #tpu.memory_space<vmem>>, vector<32x64xbf16>
    %cst = arith.constant dense<0.000000e+00> : vector<16x64xf32>
    %5 = tpu.matmul %3, %4, %cst {dimension_numbers = #tpu.dot_dimension_numbers<[1], [0], [0], [1], [0, 0, 1, 1], [], []>} : vector<16x32xbf16>, vector<32x64xbf16>, vector<16x64xf32> -> vector<16x64xf32>
    %c0_4 = arith.constant 0 : index
    %c0_5 = arith.constant 0 : index
    %6 = vector.load %arg6[%c0_4, %c0_5] : memref<1x64xf32, #tpu.memory_space<vmem>>, vector<1x64xf32>
    %7 = vector.broadcast %6 : vector<1x64xf32> to vector<16x64xf32>
    %8 = arith.addf %5, %7 : vector<16x64xf32>
    %cst_6 = arith.constant 5.000000e-01 : f32
    %9 = vector.broadcast %cst_6 : f32 to vector<16x64xf32>
    %10 = arith.mulf %9, %8 : vector<16x64xf32>
    %cst_7 = arith.constant 0.707106769 : f32
    %11 = vector.broadcast %cst_7 : f32 to vector<16x64xf32>
    %12 = arith.mulf %8, %11 : vector<16x64xf32>
    %13 = math.erf %12 : vector<16x64xf32>
    %cst_8 = arith.constant 1.000000e+00 : f32
    %14 = vector.broadcast %cst_8 : f32 to vector<16x64xf32>
    %15 = arith.addf %14, %13 : vector<16x64xf32>
    %16 = arith.mulf %10, %15 : vector<16x64xf32>
    %c0_9 = arith.constant 0 : index
    %c0_10 = arith.constant 0 : index
    %17 = vector.load %arg11[%c0_9, %c0_10] : memref<16x32xf32, #tpu.memory_space<vmem>>, vector<16x32xf32>
    %18 = arith.truncf %16 : vector<16x64xf32> to vector<16x64xbf16>
    %c0_11 = arith.constant 0 : index
    %c0_12 = arith.constant 0 : index
    %19 = vector.load %arg7[%c0_11, %c0_12] : memref<64x32xbf16, #tpu.memory_space<vmem>>, vector<64x32xbf16>
    %cst_13 = arith.constant dense<0.000000e+00> : vector<16x32xf32>
    %20 = tpu.matmul %18, %19, %cst_13 {dimension_numbers = #tpu.dot_dimension_numbers<[1], [0], [0], [1], [0, 0, 1, 1], [], []>} : vector<16x64xbf16>, vector<64x32xbf16>, vector<16x32xf32> -> vector<16x32xf32>
    %21 = arith.addf %17, %20 : vector<16x32xf32>
    %c0_14 = arith.constant 0 : index
    %c0_15 = arith.constant 0 : index
    %22 = vector.load %arg11[%c0_14, %c0_15] : memref<16x32xf32, #tpu.memory_space<vmem>>, vector<16x32xf32>
    tpu.vector_store %arg11[%c0_14, %c0_15], %21 {strides = array<i32>} : memref<16x32xf32, #tpu.memory_space<vmem>>, vector<16x32xf32>,
    %c0_i32_16 = arith.constant 0 : i32
    %23 = arith.cmpi eq, %arg1, %c0_i32_16 : i32
    %24 = arith.extui %23 : i1 to i32
    %c0_i32_17 = arith.constant 0 : i32
    %25 = arith.cmpi ne, %24, %c0_i32_17 : i32
    scf.if %25 {
      %c0_18 = arith.constant 0 : index
      %c0_19 = arith.constant 0 : index
      %26 = vector.load %arg11[%c0_18, %c0_19] : memref<16x32xf32, #tpu.memory_space<vmem>>, vector<16x32xf32>
      %c0_20 = arith.constant 0 : index
      %c0_21 = arith.constant 0 : index
      %27 = vector.load %arg8[%c0_20, %c0_21] : memref<1x32xf32, #tpu.memory_space<vmem>>, vector<1x32xf32>
      %28 = vector.broadcast %27 : vector<1x32xf32> to vector<16x32xf32>
      %29 = arith.addf %26, %28 : vector<16x32xf32>
      %c0_22 = arith.constant 0 : index
      %c0_23 = arith.constant 0 : index
      %30 = vector.load %arg9[%c0_22, %c0_23] : memref<16x32xf32, #tpu.memory_space<vmem>>, vector<16x32xf32>
      tpu.vector_store %arg9[%c0_22, %c0_23], %29 {strides = array<i32>} : memref<16x32xf32, #tpu.memory_space<vmem>>, vector<16x32xf32>,
    } else {
    }
    return
  }
  func.func @transform_0(%arg0: i32, %arg1: i32) -> (i32, i32) {
    %c0_i32 = arith.constant 0 : i32
    %c0_i32_0 = arith.constant 0 : i32
    return %arg0, %c0_i32 : i32, i32
  }
  func.func @transform_1(%arg0: i32, %arg1: i32) -> (i32, i32) {
    %c0_i32 = arith.constant 0 : i32
    %c0_i32_0 = arith.constant 0 : i32
    %c0_i32_1 = arith.constant 0 : i32
    return %c0_i32, %c0_i32_0 : i32, i32
  }
  func.func @transform_2(%arg0: i32, %arg1: i32) -> (i32, i32) {
    %c0_i32 = arith.constant 0 : i32
    %c0_i32_0 = arith.constant 0 : i32
    %c0_i32_1 = arith.constant 0 : i32
    return %c0_i32, %c0_i32_0 : i32, i32
  }
  func.func @transform_3(%arg0: i32, %arg1: i32) -> (i32, i32) {
    %c0_i32 = arith.constant 0 : i32
    %c0_i32_0 = arith.constant 0 : i32
    return %c0_i32, %arg1 : i32, i32
  }
  func.func @transform_4(%arg0: i32, %arg1: i32) -> (i32, i32) {
    %c0_i32 = arith.constant 0 : i32
    %c0_i32_0 = arith.constant 0 : i32
    return %c0_i32, %arg1 : i32, i32
  }
  func.func @transform_5(%arg0: i32, %arg1: i32) -> (i32, i32) {
    %c0_i32 = arith.constant 0 : i32
    %c0_i32_0 = arith.constant 0 : i32
    return %arg1, %c0_i32 : i32, i32
  }
  func.func @transform_6(%arg0: i32, %arg1: i32) -> (i32, i32) {
    %c0_i32 = arith.constant 0 : i32
    %c0_i32_0 = arith.constant 0 : i32
    %c0_i32_1 = arith.constant 0 : i32
    return %c0_i32, %c0_i32_0 : i32, i32
  }
  func.func @transform_7(%arg0: i32, %arg1: i32) -> (i32, i32) {
    %c0_i32 = arith.constant 0 : i32
    %c0_i32_0 = arith.constant 0 : i32
    return %arg0, %c0_i32 : i32, i32
  }
}

</mosaic_0001>

<llo_original>
// kernel: pre_norm_feed_forward.1
$region0: #{pre_norm_feed_forward.1}
  #allocation0 [shape = 'u32[]', space=smem, size = 0x4, offset = 0x4, fixed_abs, tag = 'smem constant byte address 0x4 - core index']
  #allocation1 [shape = 'u32[144,128]{1,0:T(1,128)}', space=vmem, size = 0x12000, scoped, tag = 'internal scratch']
  #allocation2 [shape = 'bf16[16,32]{1,0:T(16,128)(2,1)}', space=vmem, size = 0x1000, scoped, tag = 'scratch operand']
  #allocation3 [shape = 'f32[16,32]{1,0:T(8,128)}', space=vmem, size = 0x2000, scoped, tag = 'scratch operand']
  %s0 = inlined_call_operand.vmem [shape: f32[16,32], index: 0, kind: input, shape index: {}]
  %s1 = inlined_call_operand.vmem [shape: f32[1,32], index: 1, kind: input, shape index: {}]
  %s2 = inlined_call_operand.vmem [shape: f32[1,32], index: 2, kind: input, shape index: {}]
  %s3 = inlined_call_operand.vmem [shape: bf16[32,64], index: 3, kind: input, shape index: {}]
  %s4 = inlined_call_operand.vmem [shape: f32[1,64], index: 4, kind: input, shape index: {}]
  %s5 = inlined_call_operand.vmem [shape: bf16[64,32], index: 5, kind: input, shape index: {}]
  %s6 = inlined_call_operand.vmem [shape: f32[1,32], index: 6, kind: input, shape index: {}]
  %s7 = inlined_call_operand.hbm [shape: f32[16,32], index: 7, kind: output, shape index: {}]
  %s8 = sld [smem:[#allocation0]]
  $region46: #{pre_norm_feed_forward.1} parent=0
    _
  %s10 = ssub.s32 1, %s8
  %s11 = scalar_select 0, %s10, %s8
  $region1: #{pre_norm_feed_forward.1} parent=0
    #allocation4 [shape = 'u8[8192]{0}', space=vmem, size = 0x2000, scoped, tag = 'output window, operand 0, single buffered']
    #allocation5 [shape = 's32[1]{0}', space=sflag, size = 0x4, scoped, tag = 'scoped memory for pre_norm_feed_forward.1']
    %12 = vsyncpa [#allocation5], 0
    // Predicated region
    $region2: #{pre_norm_feed_forward.1} parent=1 // pred_check
      _
    $region3: #{pre_norm_feed_forward.1} parent=1 // pred_check_branch
      %14 = sbr.rel (0) target = $region5
    $region4: #{pre_norm_feed_forward.1} parent=1 // pred_region
      _
    $region5: #{pre_norm_feed_forward.1} parent=1 // pred_fallthru
      _
    // Predicated region
    $region6: #{pre_norm_feed_forward.1} parent=1 // pred_check
      _
    $region7: #{pre_norm_feed_forward.1} parent=1 // pred_check_branch
      %16 = sbr.rel (0) target = $region9
    $region8: #{pre_norm_feed_forward.1} parent=1 // pred_region
      _
    $region9: #{pre_norm_feed_forward.1} parent=1 // pred_fallthru
      _
    // Predicated region
    $region10: #{pre_norm_feed_forward.1} parent=1 // pred_check
      _
    $region11: #{pre_norm_feed_forward.1} parent=1 // pred_check_branch
      %18 = sbr.rel (0) target = $region13
    $region12: #{pre_norm_feed_forward.1} parent=1 // pred_region
      _
    $region13: #{pre_norm_feed_forward.1} parent=1 // pred_fallthru
      _
    // Predicated region
    $region14: #{pre_norm_feed_forward.1} parent=1 // pred_check
      _
    $region15: #{pre_norm_feed_forward.1} parent=1 // pred_check_branch
      %20 = sbr.rel (0) target = $region17
    $region16: #{pre_norm_feed_forward.1} parent=1 // pred_region
      _
    $region17: #{pre_norm_feed_forward.1} parent=1 // pred_fallthru
      _
    // Predicated region
    $region18: #{pre_norm_feed_forward.1} parent=1 // pred_check
      _
    $region19: #{pre_norm_feed_forward.1} parent=1 // pred_check_branch
      %22 = sbr.rel (0) target = $region21
    $region20: #{pre_norm_feed_forward.1} parent=1 // pred_region
      _
    $region21: #{pre_norm_feed_forward.1} parent=1 // pred_fallthru
      _
    // Predicated region
    $region22: #{pre_norm_feed_forward.1} parent=1 // pred_check
      _
    $region23: #{pre_norm_feed_forward.1} parent=1 // pred_check_branch
      %24 = sbr.rel (0) target = $region25
    $region24: #{pre_norm_feed_forward.1} parent=1 // pred_region
      _
    $region25: #{pre_norm_feed_forward.1} parent=1 // pred_fallthru
      _
    // Predicated region
    $region26: #{pre_norm_feed_forward.1} parent=1 // pred_check
      _
    $region27: #{pre_norm_feed_forward.1} parent=1 // pred_check_branch
      %26 = sbr.rel (0) target = $region29
    $region28: #{pre_norm_feed_forward.1} parent=1 // pred_region
      _
    $region29: #{pre_norm_feed_forward.1} parent=1 // pred_fallthru
      _
    %p28 = scmp.eq.s32.totalorder 0, 0
    // Predicated region
    $region30: #{pre_norm_feed_forward.1} parent=1 // pred_check
      %p29 = pneg %p28
    $region31: #{pre_norm_feed_forward.1} parent=1 // pred_check_branch
      %31 = sbr.rel (%p29) target = $region33
    $region32: #{pre_norm_feed_forward.1} parent=1 // pred_region
      %v32 = vld [vmem:[%s0] sm:$0xff]
      %v33 = vld [vmem:[%s0 + $0x8] sm:$0xff]
      %vm34 = vcmask 261120
      %v35 = vsel %vm34, %v32, 0.0
      %36 = vadd.xlane.f32.xlu0 %v35
      %v37 = vpop.xlane.xlu0 %36
      %v38 = vsel %vm34, %v33, 0.0
      %39 = vadd.xlane.f32.xlu0 %v38
      %v40 = vpop.xlane.xlu0 %39
      %v41 = vrcp.pop 32.0
      %v42 = vmul.f32 %v37, %v41
      %v43 = vmul.f32 %v40, %v41
      %v44 = vsub.f32 %v32, %v42
      %v45 = vsub.f32 %v33, %v43
      %v46 = vmul.f32 %v44, %v44
      %v47 = vmul.f32 %v45, %v45
      %v48 = vsel %vm34, %v46, 0.0
      %49 = vadd.xlane.f32.xlu0 %v48
      %v50 = vpop.xlane.xlu0 %49
      %v51 = vsel %vm34, %v47, 0.0
      %52 = vadd.xlane.f32.xlu0 %v51
      %v53 = vpop.xlane.xlu0 %52
      %v54 = vmul.f32 %v50, %v41
      %v55 = vmul.f32 %v53, %v41
      %v56 = vadd.f32 %v54, 1e-05
      %v57 = vadd.f32 %v55, 1e-05
      %v58 = vrsqrt.pop %v56
      %v59 = vrsqrt.pop %v57
      %v60 = vmul.f32 %v44, %v58
      %v61 = vmul.f32 %v45, %v59
      %v62 = vld [vmem:[%s1] sm:$0x1]
      %v64 = vlaneseq
      %v65 = vshrl.u32 %v64, 7
      %v66 = vsub.s32 0, %v65
      %v67 = vrot.slane %v62, %v66
      %v69 = vmul.f32 %v60, %v67
      %v70 = vmul.f32 %v61, %v67
      %v71 = vld [vmem:[%s2] sm:$0x1]
      %v73 = vlaneseq
      %v74 = vshrl.u32 %v73, 7
      %v75 = vsub.s32 0, %v74
      %v76 = vrot.slane %v71, %v75
      %v78 = vadd.f32 %v69, %v76
      %v79 = vadd.f32 %v70, %v76
      %v80 = vpack.c.bf16 %v79, %v78
      %81 = vst.msk [vmem:[#allocation2] sm:$0xff] %vm34, %v80
      %82 = vst.msk [vmem:[#allocation3] sm:$0xff] %vm34, 0.0
      %83 = vst.msk [vmem:[#allocation3 + $0x8] sm:$0xff] %vm34, 0.0
    $region33: #{pre_norm_feed_forward.1} parent=1 // pred_fallthru
      _
    %v84 = vld [vmem:[#allocation2] sm:$0xff]
    %v85 = vld [vmem:[%s3] sm:$0xf]
    %v86 = vld [vmem:[%s3 + $0x4] sm:$0xf]
    %v87 = vld [vmem:[%s3 + $0x8] sm:$0xf]
    %v88 = vld [vmem:[%s3 + $0xc] sm:$0xf]
    %v89 = vld [vmem:[%s4] sm:$0x1]
    %v91 = vlaneseq
    %v92 = vshrl.u32 %v91, 7
    %v93 = vsub.s32 0, %v92
    %v94 = vrot.slane %v89, %v93
    %v100 = vunpack.c.l.b16 %v85
    %v101 = vunpack.c.l.b16 %v86
    %v102 = vunpack.c.l.b16 %v87
    %v103 = vunpack.c.l.b16 %v88
    %v104 = vpack.c.b16 %v101, %v100
    %v105 = vpack.c.b16 %v103, %v102
    %vm108 = vcmask 261120
    %v110 = vsel %vm108, %v84, 0
    %112 = vmatprep.subr.bf16.mxu0 0
    %113 = vmatpush1.bf16.msra.mxu0 %v104
    %114 = vmatprep.subr.bf16.mxu0 0
    %115 = vmatpush1.bf16.msra.mxu0 %v105
    %116 = vmatprep.subr.bf16.mxu0 0
    %117 = vmatpush1.bf16.msra.mxu0 0
    %118 = vmatprep.subr.bf16.mxu0 0
    %119 = vmatpush1.bf16.msra.mxu0 0
    %120 = vmatprep.subr.bf16.mxu0 0
    %121 = vmatpush1.bf16.msra.mxu0 0
    %122 = vmatprep.subr.bf16.mxu0 0
    %123 = vmatpush1.bf16.msra.mxu0 0
    %124 = vmatprep.subr.bf16.mxu0 0
    %125 = vmatpush1.bf16.msra.mxu0 0
    %126 = vmatprep.subr.bf16.mxu0 0
    %127 = vmatpush1.bf16.msra.mxu0 0
    %128 = vmatprep.subr.bf16.mxu0 0
    %129 = vmatpush1.bf16.msra.mxu0 0
    %130 = vmatprep.subr.bf16.mxu0 0
    %131 = vmatpush1.bf16.msra.mxu0 0
    %132 = vmatprep.subr.bf16.mxu0 0
    %133 = vmatpush1.bf16.msra.mxu0 0
    %134 = vmatprep.subr.bf16.mxu0 0
    %135 = vmatpush1.bf16.msra.mxu0 0
    %136 = vmatprep.subr.bf16.mxu0 0
    %137 = vmatpush1.bf16.msra.mxu0 0
    %138 = vmatprep.subr.bf16.mxu0 0
    %139 = vmatpush1.bf16.msra.mxu0 0
    %140 = vmatprep.subr.bf16.mxu0 0
    %141 = vmatpush1.bf16.msra.mxu0 0
    %142 = vmatprep.subr.bf16.mxu0 0
    %143 = vmatpush1.bf16.msra.mxu0 0
    %144 = vmatprep.mubr.bf16.mxu0 0
    %145 = vmatmul.mubr.bf16.gmra.mrb[0].mxu0 %v110
    %v146 = vpop.f32.mrb[0].mxu0
    %v147 = vadd.f32 %v94, %v146
    %v148 = vpop.f32.mrb[0].mxu0
    %v149 = vpop.f32.mrb[0].mxu0
    %v150 = vadd.f32 %v94, %v149
    %v151 = vpop.f32.mrb[0].mxu0
    %152 = vdwg.mxu0
    %v153 = vmul.f32 %v147, 0.5
    %v154 = vmul.f32 %v150, 0.5
    %v155 = vmul.f32 %v147, 0.70710677
    %v156 = vmul.f32 %v150, 0.70710677
    %v157 = verf.f32.pop %v155
    %v158 = verf.f32.pop %v156
    %v159 = vadd.f32 %v157, 1.0
    %v160 = vadd.f32 %v158, 1.0
    %v161 = vmul.f32 %v153, %v159
    %v162 = vmul.f32 %v154, %v160
    %v163 = vld [vmem:[#allocation3] sm:$0xff]
    %v164 = vld [vmem:[#allocation3 + $0x8] sm:$0xff]
    %v165 = vpack.c.bf16 %v162, %v161
    %v166 = vld [vmem:[%s5] sm:$0xf]
    %v167 = vld [vmem:[%s5 + $0x4] sm:$0xf]
    %v168 = vld [vmem:[%s5 + $0x8] sm:$0xf]
    %v169 = vld [vmem:[%s5 + $0xc] sm:$0xf]
    %v170 = vld [vmem:[%s5 + $0x10] sm:$0xf]
    %v171 = vld [vmem:[%s5 + $0x14] sm:$0xf]
    %v172 = vld [vmem:[%s5 + $0x18] sm:$0xf]
    %v173 = vld [vmem:[%s5 + $0x1c] sm:$0xf]
    %v182 = vunpack.c.l.b16 %v166
    %v183 = vunpack.c.l.b16 %v167
    %v184 = vunpack.c.l.b16 %v168
    %v185 = vunpack.c.l.b16 %v169
    %v186 = vunpack.c.l.b16 %v170
    %v187 = vunpack.c.l.b16 %v171
    %v188 = vunpack.c.l.b16 %v172
    %v189 = vunpack.c.l.b16 %v173
    %v190 = vpack.c.b16 %v183, %v182
    %v191 = vpack.c.b16 %v185, %v184
    %v192 = vpack.c.b16 %v187, %v186
    %v193 = vpack.c.b16 %v189, %v188
    %vm198 = vcmask 523264
    %v200 = vsel %vm198, %v165, 0
    %202 = vmatprep.subr.bf16.mxu0 0
    %203 = vmatpush1.bf16.msra.mxu0 %v190
    %204 = vmatprep.subr.bf16.mxu0 0
    %205 = vmatpush1.bf16.msra.mxu0 %v191
    %206 = vmatprep.subr.bf16.mxu0 0
    %207 = vmatpush1.bf16.msra.mxu0 %v192
    %208 = vmatprep.subr.bf16.mxu0 0
    %209 = vmatpush1.bf16.msra.mxu0 %v193
    %210 = vmatprep.subr.bf16.mxu0 0
    %211 = vmatpush1.bf16.msra.mxu0 0
    %212 = vmatprep.subr.bf16.mxu0 0
    %213 = vmatpush1.bf16.msra.mxu0 0
    %214 = vmatprep.subr.bf16.mxu0 0
    %215 = vmatpush1.bf16.msra.mxu0 0
    %216 = vmatprep.subr.bf16.mxu0 0
    %217 = vmatpush1.bf16.msra.mxu0 0
    %218 = vmatprep.subr.bf16.mxu0 0
    %219 = vmatpush1.bf16.msra.mxu0 0
    %220 = vmatprep.subr.bf16.mxu0 0
    %221 = vmatpush1.bf16.msra.mxu0 0
    %222 = vmatprep.subr.bf16.mxu0 0
    %223 = vmatpush1.bf16.msra.mxu0 0
    %224 = vmatprep.subr.bf16.mxu0 0
    %225 = vmatpush1.bf16.msra.mxu0 0
    %226 = vmatprep.subr.bf16.mxu0 0
    %227 = vmatpush1.bf16.msra.mxu0 0
    %228 = vmatprep.subr.bf16.mxu0 0
    %229 = vmatpush1.bf16.msra.mxu0 0
    %230 = vmatprep.subr.bf16.mxu0 0
    %231 = vmatpush1.bf16.msra.mxu0 0
    %232 = vmatprep.subr.bf16.mxu0 0
    %233 = vmatpush1.bf16.msra.mxu0 0
    %234 = vmatprep.mubr.bf16.mxu0 0
    %235 = vmatmul.mubr.bf16.gmra.mrb[0].mxu0 %v200
    %v236 = vpop.f32.mrb[0].mxu0
    %v237 = vadd.f32 0.0, %v236
    %v238 = vpop.f32.mrb[0].mxu0
    %v239 = vpop.f32.mrb[0].mxu0
    %v240 = vadd.f32 0.0, %v239
    %v241 = vpop.f32.mrb[0].mxu0
    %242 = vdwg.mxu0
    %v243 = vadd.f32 %v163, %v237
    %v244 = vadd.f32 %v164, %v240
    %245 = vst.msk [vmem:[#allocation3] sm:$0xff] %vm108, %v243
    %246 = vst.msk [vmem:[#allocation3 + $0x8] sm:$0xff] %vm108, %v244
    // Predicated region
    $region34: #{pre_norm_feed_forward.1} parent=1 // pred_check
      %p247 = pneg %p28
    $region35: #{pre_norm_feed_forward.1} parent=1 // pred_check_branch
      %249 = sbr.rel (%p247) target = $region37
    $region36: #{pre_norm_feed_forward.1} parent=1 // pred_region
      %v250 = vld [vmem:[#allocation3] sm:$0xff]
      %v251 = vld [vmem:[#allocation3 + $0x8] sm:$0xff]
      %v252 = vld [vmem:[%s6] sm:$0x1]
      %v254 = vlaneseq
      %v255 = vshrl.u32 %v254, 7
      %v256 = vsub.s32 0, %v255
      %v257 = vrot.slane %v252, %v256
      %v259 = vadd.f32 %v250, %v257
      %v260 = vadd.f32 %v251, %v257
      %261 = vst.msk [vmem:[#allocation4] sm:$0xff] %vm108, %v259
      %262 = vst.msk [vmem:[#allocation4 + $0x8] sm:$0xff] %vm108, %v260
    $region37: #{pre_norm_feed_forward.1} parent=1 // pred_fallthru
      _
    // Predicated region
    $region38: #{pre_norm_feed_forward.1} parent=1 // pred_check
      _
    $region39: #{pre_norm_feed_forward.1} parent=1 // pred_check_branch
      %264 = sbr.rel (0) target = $region41
    $region40: #{pre_norm_feed_forward.1} parent=1 // pred_region
      %s266 = ssub.s32 256, 256
      %267 = vsyncadd [#allocation5], %s266
      %s268 = sshll.u32 [#allocation4], 4
      %s269 = int_to_ptr.vmem [resolvable:$true] %s268
      %274 = dma.vmem_to_hbm [thread:$0]  %s269, 256, %s7, [#allocation5], 128, 128, 8
    $region41: #{pre_norm_feed_forward.1} parent=1 // pred_fallthru
      _
    // Predicated region
    $region42: #{pre_norm_feed_forward.1} parent=1 // pred_check
      _
    $region43: #{pre_norm_feed_forward.1} parent=1 // pred_check_branch
      %276 = sbr.rel (0) target = $region45
    $region44: #{pre_norm_feed_forward.1} parent=1 // pred_region
      %277 = dma.done [#allocation5], 256
    $region45: #{pre_norm_feed_forward.1} parent=1 // pred_fallthru
      _
    %278 = vsyncpa [#allocation5], 1

</llo_original>
